<compile_context>
chip_gen: v5e
topology: v5e:2x2
jax: 0.10.0
libtpu: 0.0.40
codegen_flags: <defaults>
</compile_context>

<pallas_src>
import functools

import jax
import jax.numpy as jnp
from jax.experimental import pallas as pl
from jax.experimental.pallas import tpu as pltpu


_BATCH_TILE = 8
# Per-grid-step budget for the double-buffered f32 inputs; comfortably under
# the 32 MiB default scoped VMEM limit so the same tiling is safe on
# v5e/v6e (128 MiB) and v7x (64 MiB physical).
_VMEM_BUDGET_BYTES = 24 * 1024 * 1024


def _pick_hw_chunk(hw, k, b_tile=_BATCH_TILE, budget=_VMEM_BUDGET_BYTES):
    """Largest lane-dense (multiple of 128) chunk of H*W that divides H*W and
    keeps the double-buffered f32 working set under `budget`."""
    if hw % 128 != 0:
        return hw  # small / odd spatial extents: single full-width chunk
    bytes_per_elem = 2 * b_tile * (2 * k + 1) * 4  # double-buffer * (pred+gt+mask) * f32
    max_chunk = max(128, budget // bytes_per_elem)
    best = 128
    limit = min(hw, max_chunk)
    c = 128
    while c <= limit:
        if hw % c == 0:
            best = c
        c += 128
    return best


def _heatmap_loss_kernel(pred_ref, gt_ref, mask_ref, out_ref,
                         loss_acc, gt_acc, *, supervise_empty, inv_count):
    """Grid: (batch tiles, H*W chunks); chunk axis is the reduction axis.

    pred_ref/gt_ref: (B_TILE, K, HW_CHUNK) lane-dense VMEM tiles
    mask_ref:        (B_TILE, HW_CHUNK)
    out_ref:         (B_TILE, 128) per-step output block (column 0 = loss)
    loss_acc/gt_acc: (B_TILE, K) f32 per-channel partial sums (VMEM scratch)
    """
    c = pl.program_id(1)

    @pl.when(c == 0)
    def _init():
        loss_acc[...] = jnp.zeros_like(loss_acc)
        if not supervise_empty:
            gt_acc[...] = jnp.zeros_like(gt_acc)

    pred = pred_ref[...].astype(jnp.float32)   # (B, K, HWc)
    gt = gt_ref[...].astype(jnp.float32)       # (B, K, HWc)
    msk = mask_ref[...].astype(jnp.float32)    # (B, HWc)

    diff = pred - gt
    sq = diff * diff * msk[:, None, :]
    loss_acc[...] += jnp.sum(sq, axis=-1)      # (B, K) per-channel loss sums
    if not supervise_empty:
        gt_acc[...] += jnp.sum(gt, axis=-1)    # (B, K) per-channel gt mass

    @pl.when(c == pl.num_programs(1) - 1)
    def _finalize():
        per_ch = loss_acc[...]
        if not supervise_empty:
            # Scalar-level empty-channel masking: zero per-channel sums whose
            # gt has no mass, instead of broadcasting over (K, H, W).
            per_ch = jnp.where(gt_acc[...] > 0.0, per_ch, 0.0)
        total = jnp.sum(per_ch, axis=-1, keepdims=True) * inv_count   # (B, 1)
        out_ref[...] = jnp.broadcast_to(total, out_ref.shape).astype(out_ref.dtype)


def heatmap_loss2(pred, gt, mask, supervise_empty=True):
    """Pallas implementation of HeatmapLoss2.forward.

    pred, gt: [N, K, H, W]; mask: [N, H, W]. Returns per-image loss [N] (f32).
    """
    assert pred.shape == gt.shape, f"{pred.shape} vs {gt.shape}"
    N, K, H, W = pred.shape
    HW = H * W
    inv_count = 1.0 / float(K * H * W)

    b_tile = _BATCH_TILE
    n_pad = ((N + b_tile - 1) // b_tile) * b_tile

    # Lane-dense layout: flatten spatial dims to the last axis.
    pred2 = pred.reshape(N, K, HW)
    gt2 = gt.reshape(N, K, HW)
    mask2 = mask.reshape(N, HW)
    if n_pad != N:
        pad = n_pad - N
        pred2 = jnp.pad(pred2, ((0, pad), (0, 0), (0, 0)))
        gt2 = jnp.pad(gt2, ((0, pad), (0, 0), (0, 0)))
        mask2 = jnp.pad(mask2, ((0, pad), (0, 0)))

    hw_chunk = _pick_hw_chunk(HW, K, b_tile)
    grid = (n_pad // b_tile, HW // hw_chunk)

    kernel = functools.partial(
        _heatmap_loss_kernel,
        supervise_empty=supervise_empty,
        inv_count=inv_count,
    )

    out = pl.pallas_call(
        kernel,
        out_shape=jax.ShapeDtypeStruct((n_pad, 128), jnp.float32),
        grid=grid,
        in_specs=[
            pl.BlockSpec((b_tile, K, hw_chunk), lambda b, c: (b, 0, c)),
            pl.BlockSpec((b_tile, K, hw_chunk), lambda b, c: (b, 0, c)),
            pl.BlockSpec((b_tile, hw_chunk), lambda b, c: (b, c)),
        ],
        out_specs=pl.BlockSpec((b_tile, 128), lambda b, c: (b, 0)),
        scratch_shapes=[
            pltpu.VMEM((b_tile, K), jnp.float32),   # per-channel loss sums
            pltpu.VMEM((b_tile, K), jnp.float32),   # per-channel gt sums
        ],
        compiler_params=pltpu.CompilerParams(
            dimension_semantics=("parallel", "arbitrary")),
    )(pred2, gt2, mask2)

    return out[:N, 0]


class SingleLossFactory:
    """JAX/Pallas port of mmpose SingleLossFactory (forward pass only).

    The original forward only evaluates HeatmapLoss2 on the first `num_joints`
    output channels per stage and returns (heatmaps_losses, None, None); the
    AE push/pull terms are not computed by it, so none are computed here.
    """

    def __init__(self, num_joints, num_stages, ae_loss_type, with_ae_loss,
                 push_loss_factor, pull_loss_factor, with_heatmaps_loss,
                 heatmaps_loss_factor, supervise_empty=True):
        self.num_joints = num_joints
        self.num_stages = num_stages
        self.ae_loss_type = ae_loss_type
        self.with_ae_loss = with_ae_loss
        self.push_loss_factor = push_loss_factor
        self.pull_loss_factor = pull_loss_factor
        self.with_heatmaps_loss = with_heatmaps_loss
        self.heatmaps_loss_factor = heatmaps_loss_factor
        self.supervise_empty = supervise_empty

    def __call__(self, outputs, heatmaps, masks, joints=None):
        heatmaps_losses = []
        for idx in range(len(outputs)):
            if self.with_heatmaps_loss[idx]:
                heatmaps_pred = outputs[idx][:, :self.num_joints]
                loss = heatmap_loss2(heatmaps_pred, heatmaps[idx], masks[idx],
                                     supervise_empty=self.supervise_empty)
                heatmaps_losses.append(loss * self.heatmaps_loss_factor[idx])
            else:
                heatmaps_losses.append(None)
        return heatmaps_losses, None, None


def _heatmap_loss2_ref(pred, gt, mask, supervise_empty=True):
    pred = pred.astype(jnp.float32)
    gt = gt.astype(jnp.float32)
    mask = mask.astype(jnp.float32)
    loss = (pred - gt) ** 2 * mask[:, None, :, :]
    if not supervise_empty:
        empty = (jnp.sum(gt, axis=(2, 3), keepdims=True) > 0).astype(jnp.float32)
        loss = loss * empty
    return loss.mean(axis=3).mean(axis=2).mean(axis=1)


if __name__ == "__main__":
    N, K, H, W = 2, 4, 16, 16
    key = jax.random.PRNGKey(0)
    keys = jax.random.split(key, 6)

    # Two stages: stage 0 has C = 2K channels (heatmaps + AE tags), stage 1 has C = K.
    outputs = [
        jax.random.normal(keys[0], (N, 2 * K, H, W), dtype=jnp.float32),
        jax.random.normal(keys[1], (N, K, H, W), dtype=jnp.float32),
    ]
    heatmaps = [
        jax.random.uniform(keys[2], (N, K, H, W), dtype=jnp.float32),
        jax.random.uniform(keys[3], (N, K, H, W), dtype=jnp.float32),
    ]
    # Zero out one gt channel so the supervise_empty=False path is exercised.
    heatmaps = [hm.at[:, 1].set(0.0) for hm in heatmaps]
    masks = [
        (jax.random.uniform(keys[4], (N, H, W)) > 0.3).astype(jnp.float32),
        (jax.random.uniform(keys[5], (N, H, W)) > 0.3).astype(jnp.float32),
    ]
    joints = None  # unused by SingleLossFactory.forward (AE losses returned as None)

    ok = True
    for supervise_empty in (True, False):
        factory = SingleLossFactory(
            num_joints=K, num_stages=2, ae_loss_type="exp",
            with_ae_loss=[True, False],
            push_loss_factor=[0.001, 0.001], pull_loss_factor=[0.001, 0.001],
            with_heatmaps_loss=[True, True], heatmaps_loss_factor=[1.0, 0.5],
            supervise_empty=supervise_empty)

        hm_losses, _, _ = factory(outputs, heatmaps, masks, joints)
        hm_losses = jax.block_until_ready(hm_losses)

        for idx in range(2):
            ref = _heatmap_loss2_ref(outputs[idx][:, :K], heatmaps[idx], masks[idx],
                                     supervise_empty=supervise_empty)
            ref = ref * factory.heatmaps_loss_factor[idx]
            ok = ok and bool(jnp.allclose(hm_losses[idx], ref, atol=1e-5, rtol=1e-5))

    if ok:
        print("KERNEL_OK")
    else:
        raise SystemExit("mismatch vs reference")
</pallas_src>

<mosaic_0001>
module attributes {stable_mosaic.version = 11 : i64} {
  func.func @_heatmap_loss_kernel(%arg0: i32, %arg1: i32, %arg2: memref<8x4x256xf32, #tpu.memory_space<vmem>>, %arg3: memref<8x4x256xf32, #tpu.memory_space<vmem>>, %arg4: memref<8x256xf32, #tpu.memory_space<vmem>>, %arg5: memref<8x128xf32, #tpu.memory_space<vmem>>, %arg6: memref<8x4xf32, #tpu.memory_space<vmem>>, %arg7: memref<8x4xf32, #tpu.memory_space<vmem>>) attributes {dimension_semantics = [#tpu.dimension_semantics<parallel>, #tpu.dimension_semantics<arbitrary>], iteration_bounds = array<i64: 1, 1>, scalar_prefetch = 0 : i64, scratch_operands = 2 : i64, tpu.core_type = #tpu.core_type<tc>, window_params = [{transform_indices = @transform_0, window_bounds = array<i64: 8, 4, 256>}, {transform_indices = @transform_1, window_bounds = array<i64: 8, 4, 256>}, {transform_indices = @transform_2, window_bounds = array<i64: 8, 256>}, {transform_indices = @transform_3, window_bounds = array<i64: 8, 128>}]} {
    %c0_i32 = arith.constant 0 : i32
    %0 = arith.cmpi eq, %arg1, %c0_i32 : i32
    %1 = arith.extui %0 : i1 to i32
    %c0_i32_0 = arith.constant 0 : i32
    %2 = arith.cmpi ne, %1, %c0_i32_0 : i32
    scf.if %2 {
      %cst_14 = arith.constant 0.000000e+00 : f32
      %18 = vector.broadcast %cst_14 : f32 to vector<8x4xf32>
      %c0_15 = arith.constant 0 : index
      %c0_16 = arith.constant 0 : index
      %19 = vector.load %arg6[%c0_15, %c0_16] : memref<8x4xf32, #tpu.memory_space<vmem>>, vector<8x4xf32>
      tpu.vector_store %arg6[%c0_15, %c0_16], %18 {strides = array<i32>} : memref<8x4xf32, #tpu.memory_space<vmem>>, vector<8x4xf32>,
    } else {
    }
    %c0 = arith.constant 0 : index
    %c0_1 = arith.constant 0 : index
    %c0_2 = arith.constant 0 : index
    %3 = vector.load %arg2[%c0, %c0_1, %c0_2] : memref<8x4x256xf32, #tpu.memory_space<vmem>>, vector<8x4x256xf32>
    %c0_3 = arith.constant 0 : index
    %c0_4 = arith.constant 0 : index
    %c0_5 = arith.constant 0 : index
    %4 = vector.load %arg3[%c0_3, %c0_4, %c0_5] : memref<8x4x256xf32, #tpu.memory_space<vmem>>, vector<8x4x256xf32>
    %c0_6 = arith.constant 0 : index
    %c0_7 = arith.constant 0 : index
    %5 = vector.load %arg4[%c0_6, %c0_7] : memref<8x256xf32, #tpu.memory_space<vmem>>, vector<8x256xf32>
    %6 = arith.subf %3, %4 : vector<8x4x256xf32>
    %7 = arith.mulf %6, %6 : vector<8x4x256xf32>
    %8 = vector.shape_cast %5 : vector<8x256xf32> to vector<8x1x256xf32>
    %9 = vector.broadcast %8 : vector<8x1x256xf32> to vector<8x4x256xf32>
    %10 = arith.mulf %7, %9 : vector<8x4x256xf32>
    %c0_8 = arith.constant 0 : index
    %c0_9 = arith.constant 0 : index
    %11 = vector.load %arg6[%c0_8, %c0_9] : memref<8x4xf32, #tpu.memory_space<vmem>>, vector<8x4xf32>
    %cst = arith.constant dense<0.000000e+00> : vector<8x4xf32>
    %12 = vector.multi_reduction <add>, %10, %cst [2] : vector<8x4x256xf32> to vector<8x4xf32>
    %13 = arith.addf %11, %12 : vector<8x4xf32>
    %c0_10 = arith.constant 0 : index
    %c0_11 = arith.constant 0 : index
    %14 = vector.load %arg6[%c0_10, %c0_11] : memref<8x4xf32, #tpu.memory_space<vmem>>, vector<8x4xf32>
    tpu.vector_store %arg6[%c0_10, %c0_11], %13 {strides = array<i32>} : memref<8x4xf32, #tpu.memory_space<vmem>>, vector<8x4xf32>,
    %c0_i32_12 = arith.constant 0 : i32
    %15 = arith.cmpi eq, %arg1, %c0_i32_12 : i32
    %16 = arith.extui %15 : i1 to i32
    %c0_i32_13 = arith.constant 0 : i32
    %17 = arith.cmpi ne, %16, %c0_i32_13 : i32
    scf.if %17 {
      %c0_14 = arith.constant 0 : index
      %c0_15 = arith.constant 0 : index
      %18 = vector.load %arg6[%c0_14, %c0_15] : memref<8x4xf32, #tpu.memory_space<vmem>>, vector<8x4xf32>
      %cst_16 = arith.constant dense<0.000000e+00> : vector<8xf32>
      %19 = vector.multi_reduction <add>, %18, %cst_16 [1] : vector<8x4xf32> to vector<8xf32>
      %20 = vector.shape_cast %19 : vector<8xf32> to vector<8x1xf32>
      %cst_17 = arith.constant 9.765625E-4 : f32
      %21 = vector.broadcast %cst_17 : f32 to vector<8x1xf32>
      %22 = arith.mulf %20, %21 : vector<8x1xf32>
      %23 = vector.shape_cast %22 : vector<8x1xf32> to vector<8x1xf32>
      %24 = vector.broadcast %23 : vector<8x1xf32> to vector<8x128xf32>
      %c0_18 = arith.constant 0 : index
      %c0_19 = arith.constant 0 : index
      %25 = vector.load %arg5[%c0_18, %c0_19] : memref<8x128xf32, #tpu.memory_space<vmem>>, vector<8x128xf32>
      tpu.vector_store %arg5[%c0_18, %c0_19], %24 {strides = array<i32>} : memref<8x128xf32, #tpu.memory_space<vmem>>, vector<8x128xf32>,
    } else {
    }
    return
  }
  func.func @transform_0(%arg0: i32, %arg1: i32) -> (i32, i32, i32) {
    %c0_i32 = arith.constant 0 : i32
    %c0_i32_0 = arith.constant 0 : i32
    return %arg0, %c0_i32, %arg1 : i32, i32, i32
  }
  func.func @transform_1(%arg0: i32, %arg1: i32) -> (i32, i32, i32) {
    %c0_i32 = arith.constant 0 : i32
    %c0_i32_0 = arith.constant 0 : i32
    return %arg0, %c0_i32, %arg1 : i32, i32, i32
  }
  func.func @transform_2(%arg0: i32, %arg1: i32) -> (i32, i32) {
    %c0_i32 = arith.constant 0 : i32
    return %arg0, %arg1 : i32, i32
  }
  func.func @transform_3(%arg0: i32, %arg1: i32) -> (i32, i32) {
    %c0_i32 = arith.constant 0 : i32
    %c0_i32_0 = arith.constant 0 : i32
    return %arg0, %c0_i32 : i32, i32
  }
}

</mosaic_0001>

<llo_original>
// kernel: tpu_custom_call.1
$region0: #{tpu_custom_call.1}
  #allocation0 [shape = 'u32[]', space=smem, size = 0x4, offset = 0x4, fixed_abs, tag = 'smem constant byte address 0x4 - core index']
  #allocation1 [shape = 'u32[72,128]{1,0:T(1,128)}', space=vmem, size = 0x9000, scoped, tag = 'internal scratch']
  #allocation2 [shape = 'f32[8,4]{1,0:T(8,128)}', space=vmem, size = 0x1000, scoped, tag = 'scratch operand']
  #allocation3 [shape = 'f32[8,4]{1,0:T(8,128)}', space=vmem, size = 0x1000, scoped, tag = 'scratch operand']
  %s0 = inlined_call_operand.hbm [shape: f32[8,4,256], index: 0, kind: input, shape index: {}]
  %s1 = inlined_call_operand.hbm [shape: f32[8,4,256], index: 1, kind: input, shape index: {}]
  %s2 = inlined_call_operand.hbm [shape: f32[8,256], index: 2, kind: input, shape index: {}]
  %s3 = inlined_call_operand.hbm [shape: f32[8,128], index: 3, kind: output, shape index: {}]
  %s4 = sld [smem:[#allocation0]]
  $region42: #{tpu_custom_call.1} parent=0
    _
  %s6 = ssub.s32 1, %s4
  %s7 = scalar_select 0, %s6, %s4
  $region1: #{tpu_custom_call.1} parent=0
    #allocation4 [shape = 'u8[32768]{0}', space=vmem, size = 0x8000, scoped, tag = 'input window, operand 0, single buffered']
    #allocation5 [shape = 's32[1]{0}', space=sflag, size = 0x4, scoped, tag = 'scoped memory for tpu_custom_call.1']
    #allocation6 [shape = 's32[1]{0}', space=sflag, size = 0x4, scoped, tag = 'scoped memory for tpu_custom_call.1']
    #allocation7 [shape = 'u8[32768]{0}', space=vmem, size = 0x8000, scoped, tag = 'input window, operand 1, single buffered']
    #allocation8 [shape = 's32[1]{0}', space=sflag, size = 0x4, scoped, tag = 'scoped memory for tpu_custom_call.1']
    #allocation9 [shape = 'u8[8192]{0}', space=vmem, size = 0x2000, scoped, tag = 'input window, operand 2, single buffered']
    #allocation10 [shape = 'u8[4096]{0}', space=vmem, size = 0x1000, scoped, tag = 'output window, operand 0, single buffered']
    %8 = vsyncpa [#allocation5], 0
    %9 = vsyncpa [#allocation8], 0
    %10 = vsyncpa [#allocation6], 0
    // Predicated region
    $region2: #{tpu_custom_call.1} parent=1 // pred_check
      _
    $region3: #{tpu_custom_call.1} parent=1 // pred_check_branch
      %12 = sbr.rel (0) target = $region5
    $region4: #{tpu_custom_call.1} parent=1 // pred_region
      %14 = vsyncadd [#allocation5], 0
      %s15 = sshll.u32 %s0, 4
      %s16 = int_to_ptr.hbm [resolvable:$true] %s15
      %s17 = sshll.u32 [#allocation4], 4
      %s18 = int_to_ptr.vmem [resolvable:$true] %s17
      %23 = dma.hbm_to_vmem [thread:$0]  %s16, 1024, %s18, [#allocation5], 128, 128, 8
    $region5: #{tpu_custom_call.1} parent=1 // pred_fallthru
      _
    // Predicated region
    $region6: #{tpu_custom_call.1} parent=1 // pred_check
      _
    $region7: #{tpu_custom_call.1} parent=1 // pred_check_branch
      %25 = sbr.rel (0) target = $region9
    $region8: #{tpu_custom_call.1} parent=1 // pred_region
      %27 = vsyncadd [#allocation8], 0
      %s28 = sshll.u32 %s1, 4
      %s29 = int_to_ptr.hbm [resolvable:$true] %s28
      %s30 = sshll.u32 [#allocation7], 4
      %s31 = int_to_ptr.vmem [resolvable:$true] %s30
      %36 = dma.hbm_to_vmem [thread:$0]  %s29, 1024, %s31, [#allocation8], 128, 128, 8
    $region9: #{tpu_custom_call.1} parent=1 // pred_fallthru
      _
    // Predicated region
    $region10: #{tpu_custom_call.1} parent=1 // pred_check
      _
    $region11: #{tpu_custom_call.1} parent=1 // pred_check_branch
      %38 = sbr.rel (0) target = $region13
    $region12: #{tpu_custom_call.1} parent=1 // pred_region
      %40 = vsyncadd [#allocation8], 0
      %s42 = sshll.u32 %s2, 4
      %s43 = int_to_ptr.hbm [resolvable:$true] %s42
      %s44 = sshll.u32 [#allocation9], 4
      %s45 = int_to_ptr.vmem [resolvable:$true] %s44
      %47 = dma.hbm_to_vmem [thread:$0]  %s43, 256, %s45, [#allocation8]
    $region13: #{tpu_custom_call.1} parent=1 // pred_fallthru
      _
    // Predicated region
    $region14: #{tpu_custom_call.1} parent=1 // pred_check
      _
    $region15: #{tpu_custom_call.1} parent=1 // pred_check_branch
      %49 = sbr.rel (0) target = $region17
    $region16: #{tpu_custom_call.1} parent=1 // pred_region
      %51 = dma.done [#allocation5], 1024
    $region17: #{tpu_custom_call.1} parent=1 // pred_fallthru
      _
    // Predicated region
    $region18: #{tpu_custom_call.1} parent=1 // pred_check
      _
    $region19: #{tpu_custom_call.1} parent=1 // pred_check_branch
      %53 = sbr.rel (0) target = $region21
    $region20: #{tpu_custom_call.1} parent=1 // pred_region
      %55 = dma.done [#allocation8], 1024
    $region21: #{tpu_custom_call.1} parent=1 // pred_fallthru
      _
    // Predicated region
    $region22: #{tpu_custom_call.1} parent=1 // pred_check
      _
    $region23: #{tpu_custom_call.1} parent=1 // pred_check_branch
      %57 = sbr.rel (0) target = $region25
    $region24: #{tpu_custom_call.1} parent=1 // pred_region
      %59 = dma.done [#allocation8], 256
    $region25: #{tpu_custom_call.1} parent=1 // pred_fallthru
      _
    %p60 = scmp.eq.s32.totalorder 0, 0
    // Predicated region
    $region26: #{tpu_custom_call.1} parent=1 // pred_check
      %p61 = pneg %p60
    $region27: #{tpu_custom_call.1} parent=1 // pred_check_branch
      %63 = sbr.rel (%p61) target = $region29
    $region28: #{tpu_custom_call.1} parent=1 // pred_region
      %vm64 = vcmask 31744
      %65 = vst.msk [vmem:[#allocation2] sm:$0xff] %vm64, 0.0
    $region29: #{tpu_custom_call.1} parent=1 // pred_fallthru
      _
    %v66 = vld [vmem:[#allocation4] sm:$0xff]
    %v67 = vld [vmem:[#allocation4 + $0x8] sm:$0xff]
    %v68 = vld [vmem:[#allocation4 + $0x10] sm:$0xff]
    %v69 = vld [vmem:[#allocation4 + $0x18] sm:$0xff]
    %v70 = vld [vmem:[#allocation4 + $0x20] sm:$0xff]
    %v71 = vld [vmem:[#allocation4 + $0x28] sm:$0xff]
    %v72 = vld [vmem:[#allocation4 + $0x30] sm:$0xff]
    %v73 = vld [vmem:[#allocation4 + $0x38] sm:$0xff]
    %v74 = vld [vmem:[#allocation7] sm:$0xff]
    %v75 = vld [vmem:[#allocation7 + $0x8] sm:$0xff]
    %v76 = vld [vmem:[#allocation7 + $0x10] sm:$0xff]
    %v77 = vld [vmem:[#allocation7 + $0x18] sm:$0xff]
    %v78 = vld [vmem:[#allocation7 + $0x20] sm:$0xff]
    %v79 = vld [vmem:[#allocation7 + $0x28] sm:$0xff]
    %v80 = vld [vmem:[#allocation7 + $0x30] sm:$0xff]
    %v81 = vld [vmem:[#allocation7 + $0x38] sm:$0xff]
    %v82 = vld [vmem:[#allocation9] sm:$0xff]
    %v83 = vld [vmem:[#allocation9 + $0x8] sm:$0xff]
    %v84 = vsub.f32 %v66, %v74
    %v85 = vsub.f32 %v67, %v75
    %v86 = vsub.f32 %v68, %v76
    %v87 = vsub.f32 %v69, %v77
    %v88 = vsub.f32 %v70, %v78
    %v89 = vsub.f32 %v71, %v79
    %v90 = vsub.f32 %v72, %v80
    %v91 = vsub.f32 %v73, %v81
    %v92 = vmul.f32 %v84, %v84
    %v93 = vmul.f32 %v85, %v85
    %v94 = vmul.f32 %v86, %v86
    %v95 = vmul.f32 %v87, %v87
    %v96 = vmul.f32 %v88, %v88
    %v97 = vmul.f32 %v89, %v89
    %v98 = vmul.f32 %v90, %v90
    %v99 = vmul.f32 %v91, %v91
    %v102 = vrot.slane %v83, 7
    %vm103 = vcmask 1040384
    %v104 = vsel %vm103, %v82, %v102
    %vm105 = vcmask 1041409
    %v106 = vsel %vm105, %v82, %v102
    %v107 = vrot.slane %v106, 1
    %vm108 = vcmask 1042434
    %v109 = vsel %vm108, %v82, %v102
    %v110 = vrot.slane %v109, 2
    %vm111 = vcmask 1043459
    %v112 = vsel %vm111, %v82, %v102
    %v113 = vrot.slane %v112, 3
    %vm114 = vcmask 1044484
    %v115 = vsel %vm114, %v82, %v102
    %v116 = vrot.slane %v115, 4
    %vm117 = vcmask 1045509
    %v118 = vsel %vm117, %v82, %v102
    %v119 = vrot.slane %v118, 5
    %vm120 = vcmask 1046534
    %v121 = vsel %vm120, %v82, %v102
    %v122 = vrot.slane %v121, 6
    %vm123 = vcmask 1046528
    %v124 = vsel %vm123, %v102, %v82
    %v125 = vrot.slane %v124, 7
    %v126 = vperm.slane %v104, 0
    %v127 = vperm.slane %v104, 1
    %v128 = vperm.slane %v107, 0
    %v129 = vperm.slane %v107, 1
    %v130 = vperm.slane %v110, 0
    %v131 = vperm.slane %v110, 1
    %v132 = vperm.slane %v113, 0
    %v133 = vperm.slane %v113, 1
    %v134 = vperm.slane %v116, 0
    %v135 = vperm.slane %v116, 1
    %v136 = vperm.slane %v119, 0
    %v137 = vperm.slane %v119, 1
    %v138 = vperm.slane %v122, 0
    %v139 = vperm.slane %v122, 1
    %v140 = vperm.slane %v125, 0
    %v141 = vperm.slane %v125, 1
    %v142 = vrot.slane %v127, 4
    %v143 = vrot.slane %v129, 4
    %v144 = vrot.slane %v131, 4
    %v145 = vrot.slane %v133, 4
    %v146 = vrot.slane %v135, 4
    %v147 = vrot.slane %v137, 4
    %v148 = vrot.slane %v139, 4
    %v149 = vrot.slane %v141, 4
    %vm150 = vcmask 1043456
    %v151 = vsel %vm150, %v126, %v142
    %v152 = vsel %vm150, %v128, %v143
    %v153 = vsel %vm150, %v130, %v144
    %v154 = vsel %vm150, %v132, %v145
    %v155 = vsel %vm150, %v134, %v146
    %v156 = vsel %vm150, %v136, %v147
    %v157 = vsel %vm150, %v138, %v148
    %v158 = vsel %vm150, %v140, %v149
    %v167 = vmul.f32 %v92, %v151
    %v168 = vmul.f32 %v93, %v152
    %v169 = vmul.f32 %v94, %v153
    %v170 = vmul.f32 %v95, %v154
    %v171 = vmul.f32 %v96, %v155
    %v172 = vmul.f32 %v97, %v156
    %v173 = vmul.f32 %v98, %v157
    %v174 = vmul.f32 %v99, %v158
    %v175 = vld [vmem:[#allocation2] sm:$0xff]
    %184 = vst [vmem:[#allocation1] ss:$2 sm:$0xff] %v167
    %v185 = vld.sshfl [vmem:[#allocation1] sm:$0xff pattern:$0x75316420]
    %v186 = vld.sshfl [vmem:[#allocation1 + $0x8] sm:$0xff pattern:$0x75316420]
    %s187 = scalar_lea.vmem [#allocation1], 16
    %188 = vst [vmem:[%s187] ss:$2 sm:$0xff] %v168
    %v189 = vld.sshfl [vmem:[#allocation1 + $0x10] sm:$0xff pattern:$0x75316420]
    %v190 = vld.sshfl [vmem:[#allocation1 + $0x18] sm:$0xff pattern:$0x75316420]
    %s191 = scalar_lea.vmem [#allocation1], 32
    %192 = vst [vmem:[%s191] ss:$2 sm:$0xff] %v169
    %v193 = vld.sshfl [vmem:[#allocation1 + $0x20] sm:$0xff pattern:$0x75316420]
    %v194 = vld.sshfl [vmem:[#allocation1 + $0x28] sm:$0xff pattern:$0x75316420]
    %s195 = scalar_lea.vmem [#allocation1], 48
    %196 = vst [vmem:[%s195] ss:$2 sm:$0xff] %v170
    %v197 = vld.sshfl [vmem:[#allocation1 + $0x30] sm:$0xff pattern:$0x75316420]
    %v198 = vld.sshfl [vmem:[#allocation1 + $0x38] sm:$0xff pattern:$0x75316420]
    %199 = vst [vmem:[#allocation1] ss:$2 sm:$0xff] %v171
    %v200 = vld.sshfl [vmem:[#allocation1] sm:$0xff pattern:$0x75316420]
    %v201 = vld.sshfl [vmem:[#allocation1 + $0x8] sm:$0xff pattern:$0x75316420]
    %202 = vst [vmem:[%s187] ss:$2 sm:$0xff] %v172
    %v203 = vld.sshfl [vmem:[#allocation1 + $0x10] sm:$0xff pattern:$0x75316420]
    %v204 = vld.sshfl [vmem:[#allocation1 + $0x18] sm:$0xff pattern:$0x75316420]
    %205 = vst [vmem:[%s191] ss:$2 sm:$0xff] %v173
    %v206 = vld.sshfl [vmem:[#allocation1 + $0x20] sm:$0xff pattern:$0x75316420]
    %v207 = vld.sshfl [vmem:[#allocation1 + $0x28] sm:$0xff pattern:$0x75316420]
    %208 = vst [vmem:[%s195] ss:$2 sm:$0xff] %v174
    %v209 = vld.sshfl [vmem:[#allocation1 + $0x30] sm:$0xff pattern:$0x75316420]
    %v210 = vld.sshfl [vmem:[#allocation1 + $0x38] sm:$0xff pattern:$0x75316420]
    %v227 = vsel %vm150, %v185, 0.0
    %v228 = vsel %vm150, %v186, 0.0
    %v229 = vadd.f32 %v227, %v228
    %230 = vadd.xlane.f32.xlu0 %v229
    %v231 = vpop.xlane.xlu0 %230
    %v232 = vsel %vm150, %v189, 0.0
    %v233 = vsel %vm150, %v190, 0.0
    %v234 = vadd.f32 %v232, %v233
    %235 = vadd.xlane.f32.xlu0 %v234
    %v236 = vpop.xlane.xlu0 %235
    %v237 = vsel %vm150, %v193, 0.0
    %v238 = vsel %vm150, %v194, 0.0
    %v239 = vadd.f32 %v237, %v238
    %240 = vadd.xlane.f32.xlu0 %v239
    %v241 = vpop.xlane.xlu0 %240
    %v242 = vsel %vm150, %v197, 0.0
    %v243 = vsel %vm150, %v198, 0.0
    %v244 = vadd.f32 %v242, %v243
    %245 = vadd.xlane.f32.xlu0 %v244
    %v246 = vpop.xlane.xlu0 %245
    %v247 = vsel %vm150, %v200, 0.0
    %v248 = vsel %vm150, %v201, 0.0
    %v249 = vadd.f32 %v247, %v248
    %250 = vadd.xlane.f32.xlu0 %v249
    %v251 = vpop.xlane.xlu0 %250
    %v252 = vsel %vm150, %v203, 0.0
    %v253 = vsel %vm150, %v204, 0.0
    %v254 = vadd.f32 %v252, %v253
    %255 = vadd.xlane.f32.xlu0 %v254
    %v256 = vpop.xlane.xlu0 %255
    %v257 = vsel %vm150, %v206, 0.0
    %v258 = vsel %vm150, %v207, 0.0
    %v259 = vadd.f32 %v257, %v258
    %260 = vadd.xlane.f32.xlu0 %v259
    %v261 = vpop.xlane.xlu0 %260
    %v262 = vsel %vm150, %v209, 0.0
    %v263 = vsel %vm150, %v210, 0.0
    %v264 = vadd.f32 %v262, %v263
    %265 = vadd.xlane.f32.xlu0 %v264
    %v266 = vpop.xlane.xlu0 %265
    %v275 = vlaneseq
    %v276 = vand.u32 %v275, 127
    %v277 = vperm.slane %v231, %v276
    %v278 = vperm.slane %v236, %v276
    %v279 = vperm.slane %v241, %v276
    %v280 = vperm.slane %v246, %v276
    %v281 = vperm.slane %v251, %v276
    %v282 = vperm.slane %v256, %v276
    %v283 = vperm.slane %v261, %v276
    %v284 = vperm.slane %v266, %v276
    %v285 = vsel %vm105, %v278, %v277
    %v286 = vsel %vm108, %v279, %v285
    %v287 = vsel %vm111, %v280, %v286
    %v288 = vsel %vm114, %v281, %v287
    %v289 = vsel %vm117, %v282, %v288
    %v290 = vsel %vm120, %v283, %v289
    %vm291 = vcmask 1047559
    %v292 = vsel %vm291, %v284, %v290
    %v294 = vadd.f32 %v175, %v292
    %vm295 = vcmask 31744
    %296 = vst.msk [vmem:[#allocation2] sm:$0xff] %vm295, %v294
    // Predicated region
    $region30: #{tpu_custom_call.1} parent=1 // pred_check
      %p297 = pneg %p60
    $region31: #{tpu_custom_call.1} parent=1 // pred_check_branch
      %299 = sbr.rel (%p297) target = $region33
    $region32: #{tpu_custom_call.1} parent=1 // pred_region
      %v300 = vld [vmem:[#allocation2] sm:$0xff]
      %v301 = vsel %vm295, %v300, 0.0
      %302 = vadd.xlane.f32.xlu0 %v301
      %v303 = vpop.xlane.xlu0 %302
      %v304 = vmul.f32 %v303, 0.0009765625
      %305 = vst [vmem:[#allocation10] sm:$0xff] %v304
    $region33: #{tpu_custom_call.1} parent=1 // pred_fallthru
      _
    // Predicated region
    $region34: #{tpu_custom_call.1} parent=1 // pred_check
      _
    $region35: #{tpu_custom_call.1} parent=1 // pred_check_branch
      %307 = sbr.rel (0) target = $region37
    $region36: #{tpu_custom_call.1} parent=1 // pred_region
      %309 = vsyncadd [#allocation6], 0
      %s311 = sshll.u32 [#allocation10], 4
      %s312 = int_to_ptr.vmem [resolvable:$true] %s311
      %s313 = sshll.u32 %s3, 4
      %s314 = int_to_ptr.hbm [resolvable:$true] %s313
      %316 = dma.vmem_to_hbm [thread:$0]  %s312, 128, %s314, [#allocation6]
    $region37: #{tpu_custom_call.1} parent=1 // pred_fallthru
      _
    // Predicated region
    $region38: #{tpu_custom_call.1} parent=1 // pred_check
      _
    $region39: #{tpu_custom_call.1} parent=1 // pred_check_branch
      %318 = sbr.rel (0) target = $region41
    $region40: #{tpu_custom_call.1} parent=1 // pred_region
      %320 = dma.done [#allocation6], 128
    $region41: #{tpu_custom_call.1} parent=1 // pred_fallthru
      _
    %321 = vsyncpa [#allocation5], 1
    %322 = vsyncpa [#allocation8], 1
    %323 = vsyncpa [#allocation6], 1

</llo_original>
